<compile_context>
chip_gen: v7x
topology: tpu7x:2x2x1
jax: 0.10.0
libtpu: 0.0.40
codegen_flags: <defaults>
</compile_context>

<pallas_src>
import functools

import jax
import jax.numpy as jnp
from jax.experimental import pallas as pl
from jax.experimental.pallas import tpu as pltpu


def _round_up(x, m):
    return ((x + m - 1) // m) * m


def _mlp_kernel(x_ref, w1_ref, b1_ref, w2_ref, b2_ref, o_ref):
    # fc1 on the MXU: [TILE_B, D](bf16) @ [D, H_pad](bf16), f32 accumulation.
    h = jnp.dot(x_ref[...], w1_ref[...], preferred_element_type=jnp.float32)
    # bias + ReLU on the VPU (f32).
    h = jnp.maximum(h + b1_ref[...], 0.0)
    # fc2 as VPU multiply + XLU lane-reduce instead of an N=1 MXU matmul.
    z = jnp.sum(h * w2_ref[...], axis=-1, keepdims=True) + b2_ref[0, 0]
    # sigmoid: exp on the EUP; approx reciprocal also on the EUP (idle slot) -> cheap epilogue.
    o_ref[...] = pl.reciprocal(1.0 + jnp.exp(-z), approx=True).astype(o_ref.dtype)


def nnbp_forward(x, w1, b1, w2, b2, *, tile_b=2048, compute_dtype=jnp.bfloat16):
    """Fused forward pass of NNBPClassifier.

    x:  [B, D] float32 (cast to bf16 at the kernel boundary)
    w1: [D, H], b1: [H] or [1, H]
    w2: [H, 1] or [H], b2: scalar / [1, 1]
    returns: [B, 1] float32 sigmoid probabilities.
    """
    B, D = x.shape
    H = w1.shape[1]
    assert w1.shape[0] == D

    # Normalize parameter shapes.
    b1 = jnp.asarray(b1, jnp.float32).reshape(1, H)
    w2 = jnp.asarray(w2, jnp.float32).reshape(H, 1)
    b2 = jnp.asarray(b2, jnp.float32).reshape(1, 1)

    # Pad the hidden dim to the 128-lane vreg width. Zero-padded columns are exactly
    # neutral: relu(x @ 0 + 0) = 0 and 0 * w2_pad = 0. Weights are tiny and VMEM-resident.
    H_pad = max(128, _round_up(H, 128))
    if H_pad != H:
        w1 = jnp.pad(w1, ((0, 0), (0, H_pad - H)))
        b1 = jnp.pad(b1, ((0, 0), (0, H_pad - H)))
        w2 = jnp.pad(w2, ((0, H_pad - H), (0, 0)))
    w2_row = w2.reshape(1, H_pad)

    # bf16 MXU inputs, f32 accumulation (in production, produce x in bf16 upstream).
    x_c = x.astype(compute_dtype)
    w1_c = w1.astype(compute_dtype)

    # Batch tile: large (>=2K rows) for DMA/compute pipelining; clamp for small batches.
    tile_b = int(min(tile_b, _round_up(B, 8)))
    grid = (pl.cdiv(B, tile_b),)

    return pl.pallas_call(
        _mlp_kernel,
        out_shape=jax.ShapeDtypeStruct((B, 1), jnp.float32),
        grid=grid,
        in_specs=[
            pl.BlockSpec((tile_b, D), lambda i: (i, 0)),        # x: streamed batch tiles
            pl.BlockSpec((D, H_pad), lambda i: (0, 0)),         # w1: resident
            pl.BlockSpec((1, H_pad), lambda i: (0, 0)),         # b1: resident
            pl.BlockSpec((1, H_pad), lambda i: (0, 0)),         # w2 (as a lane row): resident
            pl.BlockSpec(memory_space=pltpu.MemorySpace.SMEM),  # b2: scalar in SMEM
        ],
        out_specs=pl.BlockSpec((tile_b, 1), lambda i: (i, 0)),
        compiler_params=pltpu.CompilerParams(
            dimension_semantics=("parallel",),      # shard batch tiles across TCs on v7x
            vmem_limit_bytes=32 * 1024 * 1024,      # safe on v5e/v6e/v7x; ample for ~4 MB use
        ),
    )(x_c, w1_c, b1, w2_row, b2)


def init_params(key, input_dim, hidden_dim):
    """Deterministic PyTorch-style Linear init: U(-1/sqrt(fan_in), 1/sqrt(fan_in))."""
    k1, k2, k3, k4 = jax.random.split(key, 4)
    bound1 = 1.0 / jnp.sqrt(jnp.float32(input_dim))
    bound2 = 1.0 / jnp.sqrt(jnp.float32(hidden_dim))
    w1 = jax.random.uniform(k1, (input_dim, hidden_dim), jnp.float32, -bound1, bound1)
    b1 = jax.random.uniform(k2, (1, hidden_dim), jnp.float32, -bound1, bound1)
    w2 = jax.random.uniform(k3, (hidden_dim, 1), jnp.float32, -bound2, bound2)
    b2 = jax.random.uniform(k4, (1, 1), jnp.float32, -bound2, bound2)
    return w1, b1, w2, b2


if __name__ == "__main__":
    batch = 256          # small demo size; use tile_b=128 to exercise a 2-step grid
    input_dim = 32
    hidden_dim = 64      # module spec: hidden_dim = 64

    key = jax.random.PRNGKey(0)
    kx, kp = jax.random.split(key)
    x = jax.random.normal(kx, (batch, input_dim), dtype=jnp.float32)
    w1, b1, w2, b2 = init_params(kp, input_dim, hidden_dim)

    out = nnbp_forward(x, w1, b1, w2, b2, tile_b=128)
    out = jax.block_until_ready(out)

    # Reference in plain JAX, computed on the same bf16-rounded matmul inputs the
    # kernel sees (accumulation stays f32), so tolerance covers only accumulation
    # order + the approx EUP reciprocal in the sigmoid.
    x_r = x.astype(jnp.bfloat16).astype(jnp.float32)
    w1_r = w1.astype(jnp.bfloat16).astype(jnp.float32)
    h_ref = jnp.maximum(x_r @ w1_r + b1, 0.0)
    ref = jax.nn.sigmoid(h_ref @ w2 + b2)

    assert out.shape == (batch, 1)
    assert bool(jnp.all(jnp.isfinite(out)))
    assert jnp.allclose(out, ref, atol=2e-3, rtol=2e-3), float(jnp.max(jnp.abs(out - ref)))

    print("KERNEL_OK")
</pallas_src>

<mosaic_0001>
module attributes {stable_mosaic.version = 11 : i64} {
  func.func @_mlp_kernel(%arg0: i32, %arg1: memref<128x32xbf16, #tpu.memory_space<vmem>>, %arg2: memref<32x128xbf16, #tpu.memory_space<vmem>>, %arg3: memref<1x128xf32, #tpu.memory_space<vmem>>, %arg4: memref<1x128xf32, #tpu.memory_space<vmem>>, %arg5: memref<1x1xf32, #tpu.memory_space<smem>>, %arg6: memref<128x1xf32, #tpu.memory_space<vmem>>) attributes {dimension_semantics = [#tpu.dimension_semantics<parallel>], iteration_bounds = array<i64: 2>, scalar_prefetch = 0 : i64, scratch_operands = 0 : i64, tpu.core_type = #tpu.core_type<tc>, window_params = [{transform_indices = @transform_0, window_bounds = array<i64: 128, 32>}, {pipeline_mode = #tpu.pipeline_mode<synchronous>, transform_indices = @transform_1, window_bounds = array<i64: 32, 128>}, {pipeline_mode = #tpu.pipeline_mode<synchronous>, transform_indices = @transform_2, window_bounds = array<i64: 1, 128>}, {pipeline_mode = #tpu.pipeline_mode<synchronous>, transform_indices = @transform_3, window_bounds = array<i64: 1, 128>}, {transform_indices = @transform_4, window_bounds = array<i64: 1, 1>}, {transform_indices = @transform_5, window_bounds = array<i64: 128, 1>}]} {
    %c0 = arith.constant 0 : index
    %c0_0 = arith.constant 0 : index
    %0 = vector.load %arg1[%c0, %c0_0] : memref<128x32xbf16, #tpu.memory_space<vmem>>, vector<128x32xbf16>
    %c0_1 = arith.constant 0 : index
    %c0_2 = arith.constant 0 : index
    %1 = vector.load %arg2[%c0_1, %c0_2] : memref<32x128xbf16, #tpu.memory_space<vmem>>, vector<32x128xbf16>
    %cst = arith.constant dense<0.000000e+00> : vector<128x128xf32>
    %2 = tpu.matmul %0, %1, %cst {dimension_numbers = #tpu.dot_dimension_numbers<[1], [0], [0], [1], [0, 0, 1, 1], [], []>} : vector<128x32xbf16>, vector<32x128xbf16>, vector<128x128xf32> -> vector<128x128xf32>
    %c0_3 = arith.constant 0 : index
    %c0_4 = arith.constant 0 : index
    %3 = vector.load %arg3[%c0_3, %c0_4] : memref<1x128xf32, #tpu.memory_space<vmem>>, vector<1x128xf32>
    %4 = vector.broadcast %3 : vector<1x128xf32> to vector<128x128xf32>
    %5 = arith.addf %2, %4 : vector<128x128xf32>
    %cst_5 = arith.constant 0.000000e+00 : f32
    %6 = vector.broadcast %cst_5 : f32 to vector<128x128xf32>
    %7 = arith.maximumf %5, %6 : vector<128x128xf32>
    %c0_6 = arith.constant 0 : index
    %c0_7 = arith.constant 0 : index
    %8 = vector.load %arg4[%c0_6, %c0_7] : memref<1x128xf32, #tpu.memory_space<vmem>>, vector<1x128xf32>
    %9 = vector.broadcast %8 : vector<1x128xf32> to vector<128x128xf32>
    %10 = arith.mulf %7, %9 : vector<128x128xf32>
    %cst_8 = arith.constant dense<0.000000e+00> : vector<128xf32>
    %11 = vector.multi_reduction <add>, %10, %cst_8 [1] : vector<128x128xf32> to vector<128xf32>
    %12 = vector.shape_cast %11 : vector<128xf32> to vector<128x1xf32>
    %c0_9 = arith.constant 0 : index
    %c0_10 = arith.constant 0 : index
    %13 = memref.load %arg5[%c0_9, %c0_10] : memref<1x1xf32, #tpu.memory_space<smem>>
    %14 = vector.broadcast %13 : f32 to vector<128x1xf32>
    %15 = arith.addf %12, %14 : vector<128x1xf32>
    %cst_11 = arith.constant 0.000000e+00 : f32
    %16 = vector.broadcast %cst_11 : f32 to vector<128x1xf32>
    %17 = arith.subf %16, %15 : vector<128x1xf32>
    %18 = math.exp %17 : vector<128x1xf32>
    %cst_12 = arith.constant 1.000000e+00 : f32
    %19 = vector.broadcast %cst_12 : f32 to vector<128x1xf32>
    %20 = arith.addf %19, %18 : vector<128x1xf32>
    %21 = tpu.reciprocal %20 {approx = true} : vector<128x1xf32> -> vector<128x1xf32>
    %c0_13 = arith.constant 0 : index
    %c0_14 = arith.constant 0 : index
    %22 = vector.load %arg6[%c0_13, %c0_14] : memref<128x1xf32, #tpu.memory_space<vmem>>, vector<128x1xf32>
    tpu.vector_store %arg6[%c0_13, %c0_14], %21 {strides = array<i32>} : memref<128x1xf32, #tpu.memory_space<vmem>>, vector<128x1xf32>,
    return
  }
  func.func @transform_0(%arg0: i32) -> (i32, i32) {
    %c0_i32 = arith.constant 0 : i32
    %c0_i32_0 = arith.constant 0 : i32
    return %arg0, %c0_i32 : i32, i32
  }
  func.func @transform_1(%arg0: i32) -> (i32, i32) {
    %c0_i32 = arith.constant 0 : i32
    %c0_i32_0 = arith.constant 0 : i32
    %c0_i32_1 = arith.constant 0 : i32
    return %c0_i32, %c0_i32_0 : i32, i32
  }
  func.func @transform_2(%arg0: i32) -> (i32, i32) {
    %c0_i32 = arith.constant 0 : i32
    %c0_i32_0 = arith.constant 0 : i32
    %c0_i32_1 = arith.constant 0 : i32
    return %c0_i32, %c0_i32_0 : i32, i32
  }
  func.func @transform_3(%arg0: i32) -> (i32, i32) {
    %c0_i32 = arith.constant 0 : i32
    %c0_i32_0 = arith.constant 0 : i32
    %c0_i32_1 = arith.constant 0 : i32
    return %c0_i32, %c0_i32_0 : i32, i32
  }
  func.func @transform_4(%arg0: i32) -> (i32, i32) {
    %c0_i32 = arith.constant 0 : i32
    %c0_i32_0 = arith.constant 0 : i32
    %c0_i32_1 = arith.constant 0 : i32
    return %c0_i32, %c0_i32_0 : i32, i32
  }
  func.func @transform_5(%arg0: i32) -> (i32, i32) {
    %c0_i32 = arith.constant 0 : i32
    %c0_i32_0 = arith.constant 0 : i32
    return %arg0, %c0_i32 : i32, i32
  }
}

</mosaic_0001>

<llo_original>
// kernel: tpu_custom_call.1
$region0: #{tpu_custom_call.1}
  #allocation0 [shape = 'u32[]', space=smem, size = 0x4, offset = 0x4, fixed_abs, tag = 'smem constant byte address 0x4 - core index']
  #allocation1 [shape = 'u32[144,128]{1,0:T(1,128)}', space=vmem, size = 0x12000, scoped, tag = 'internal scratch']
  #allocation2 [shape = 'f32[1,1]{1,0:T(1,128)S(6)}', space=smem, size = 0x200, scoped, tag = 'scoped memory for tpu_custom_call.1']
  %s0 = inlined_call_operand.vmem [shape: bf16[256,32], index: 0, kind: input, shape index: {}]
  %s1 = inlined_call_operand.vmem [shape: bf16[32,128], index: 1, kind: input, shape index: {}]
  %s2 = inlined_call_operand.vmem [shape: f32[1,128], index: 2, kind: input, shape index: {}]
  %s3 = inlined_call_operand.vmem [shape: f32[1,128], index: 3, kind: input, shape index: {}]
  %s4 = inlined_call_operand.<no memory space> [shape: f32[1,1], index: 4, kind: input, shape index: {}]
  %s5 = inlined_call_operand.vmem [shape: f32[256,1], index: 5, kind: output, shape index: {}]
  %s6 = sld [smem:[#allocation0]]
  $region53: #{tpu_custom_call.1} parent=0
    _
  %s8 = ssub.s32 1, %s6
  %s9 = scalar_select 0, %s8, %s6
  %10 = sst [smem:[#allocation2]] %s4
  loop: start=0, step=1, limit=4
  $region2: #{tpu_custom_call.1} parent=0 // loop_pre_header
    _
  $region3: #{tpu_custom_call.1} parent=0 // loop_header
    %s12 = sphi 0, %s16
    %p13 = scmp.ge.s32.totalorder %s12, 4
    %s22 = sphi 0, %s24
    %s25 = sphi 0, %s22
    %s26 = sphi 0, %s25
    %s42 = sphi 0, %s26
    %s46 = sphi 0, %s46
    %s48 = sphi 0, %s46
    %s49 = sphi 0, %s48
    %s63 = sphi 0, %s49
    %s67 = sphi 0, %s67
    %s69 = sphi 0, %s67
    %s70 = sphi 0, %s69
    %s84 = sphi 0, %s70
    %s88 = sphi 0, %s88
    %s90 = sphi 0, %s88
    %s91 = sphi 0, %s90
    %s105 = sphi 0, %s91
    %s109 = sphi 0, %s109
    %s111 = sphi 0, %s109
    %s112 = sphi 0, %s111
    %s126 = sphi 0, %s112
    %s132 = sphi 0, %s134
    %s135 = sphi 0, %s132
    %s136 = sphi 0, %s135
    %s152 = sphi 0, %s136
  $region4: #{tpu_custom_call.1} parent=0 // loop_header_branch
    %15 = sbr.rel (%p13) target = $region8
  $region5: #{tpu_custom_call.1} parent=0 // loop_body
    %s17 = ssub.s32 %s12, 1
    %s18 = ssub.s32 %s12, 2
    %s19 = sadd.s32 %s12, 1
    %s20 = ssub.s32 %s12, %s19
    %p21 = scmp.eq.s32.totalorder %s20, 0
    %s23 = sadd.s32 %s22, 1
    %s24 = scalar_select %p21, %s22, %s23
    %p27 = pneg %p21
    %p28 = scmp.eq.s32.totalorder %s12, 1
    %p29 = por %p27, %p28
    %p30 = scmp.ne.s32.totalorder %s22, %s25
    %p31 = scmp.eq.s32.totalorder %s12, 0
    %p32 = por %p30, %p31
    %p33 = scmp.ne.s32.totalorder %s22, %s25
    %p34 = scmp.eq.s32.totalorder %s17, 1
    %p35 = por %p33, %p34
    %p36 = scmp.ne.s32.totalorder %s25, %s26
    %p37 = scmp.eq.s32.totalorder %s17, 0
    %p38 = por %p36, %p37
    %p39 = scmp.ne.s32.totalorder %s25, %s26
    %p40 = scmp.eq.s32.totalorder %s18, 1
    %p41 = por %p39, %p40
    %p43 = scmp.ne.s32.totalorder %s26, %s42
    %p44 = scmp.eq.s32.totalorder %s18, 0
    %p45 = por %p43, %p44
    %s47 = sadd.s32 %s46, 1
    %p50 = scmp.eq.s32.totalorder %s12, 1
    %p51 = scmp.ne.s32.totalorder %s46, %s48
    %p52 = scmp.eq.s32.totalorder %s12, 0
    %p53 = por %p51, %p52
    %p54 = scmp.ne.s32.totalorder %s46, %s48
    %p55 = scmp.eq.s32.totalorder %s17, 1
    %p56 = por %p54, %p55
    %p57 = scmp.ne.s32.totalorder %s48, %s49
    %p58 = scmp.eq.s32.totalorder %s17, 0
    %p59 = por %p57, %p58
    %p60 = scmp.ne.s32.totalorder %s48, %s49
    %p61 = scmp.eq.s32.totalorder %s18, 1
    %p62 = por %p60, %p61
    %p64 = scmp.ne.s32.totalorder %s49, %s63
    %p65 = scmp.eq.s32.totalorder %s18, 0
    %p66 = por %p64, %p65
    %s68 = sadd.s32 %s67, 1
    %p71 = scmp.eq.s32.totalorder %s12, 1
    %p72 = scmp.ne.s32.totalorder %s67, %s69
    %p73 = scmp.eq.s32.totalorder %s12, 0
    %p74 = por %p72, %p73
    %p75 = scmp.ne.s32.totalorder %s67, %s69
    %p76 = scmp.eq.s32.totalorder %s17, 1
    %p77 = por %p75, %p76
    %p78 = scmp.ne.s32.totalorder %s69, %s70
    %p79 = scmp.eq.s32.totalorder %s17, 0
    %p80 = por %p78, %p79
    %p81 = scmp.ne.s32.totalorder %s69, %s70
    %p82 = scmp.eq.s32.totalorder %s18, 1
    %p83 = por %p81, %p82
    %p85 = scmp.ne.s32.totalorder %s70, %s84
    %p86 = scmp.eq.s32.totalorder %s18, 0
    %p87 = por %p85, %p86
    %s89 = sadd.s32 %s88, 1
    %p92 = scmp.eq.s32.totalorder %s12, 1
    %p93 = scmp.ne.s32.totalorder %s88, %s90
    %p94 = scmp.eq.s32.totalorder %s12, 0
    %p95 = por %p93, %p94
    %p96 = scmp.ne.s32.totalorder %s88, %s90
    %p97 = scmp.eq.s32.totalorder %s17, 1
    %p98 = por %p96, %p97
    %p99 = scmp.ne.s32.totalorder %s90, %s91
    %p100 = scmp.eq.s32.totalorder %s17, 0
    %p101 = por %p99, %p100
    %p102 = scmp.ne.s32.totalorder %s90, %s91
    %p103 = scmp.eq.s32.totalorder %s18, 1
    %p104 = por %p102, %p103
    %p106 = scmp.ne.s32.totalorder %s91, %s105
    %p107 = scmp.eq.s32.totalorder %s18, 0
    %p108 = por %p106, %p107
    %s110 = sadd.s32 %s109, 1
    %p113 = scmp.eq.s32.totalorder %s12, 1
    %p114 = scmp.ne.s32.totalorder %s109, %s111
    %p115 = scmp.eq.s32.totalorder %s12, 0
    %p116 = por %p114, %p115
    %p117 = scmp.ne.s32.totalorder %s109, %s111
    %p118 = scmp.eq.s32.totalorder %s17, 1
    %p119 = por %p117, %p118
    %p120 = scmp.ne.s32.totalorder %s111, %s112
    %p121 = scmp.eq.s32.totalorder %s17, 0
    %p122 = por %p120, %p121
    %p123 = scmp.ne.s32.totalorder %s111, %s112
    %p124 = scmp.eq.s32.totalorder %s18, 1
    %p125 = por %p123, %p124
    %p127 = scmp.ne.s32.totalorder %s112, %s126
    %p128 = scmp.eq.s32.totalorder %s18, 0
    %p129 = por %p127, %p128
    %s130 = ssub.s32 %s12, %s19
    %p131 = scmp.eq.s32.totalorder %s130, 0
    %s133 = sadd.s32 %s132, 1
    %s134 = scalar_select %p131, %s132, %s133
    %p137 = pneg %p131
    %p138 = scmp.eq.s32.totalorder %s12, 1
    %p139 = por %p137, %p138
    %p140 = scmp.ne.s32.totalorder %s132, %s135
    %p141 = scmp.eq.s32.totalorder %s12, 0
    %p142 = por %p140, %p141
    %p143 = scmp.ne.s32.totalorder %s132, %s135
    %p144 = scmp.eq.s32.totalorder %s17, 1
    %p145 = por %p143, %p144
    %p146 = scmp.ne.s32.totalorder %s135, %s136
    %p147 = scmp.eq.s32.totalorder %s17, 0
    %p148 = por %p146, %p147
    %p149 = scmp.ne.s32.totalorder %s135, %s136
    %p150 = scmp.eq.s32.totalorder %s18, 1
    %p151 = por %p149, %p150
    %p153 = scmp.ne.s32.totalorder %s136, %s152
    %p154 = scmp.eq.s32.totalorder %s18, 0
    %p155 = por %p153, %p154
    %p156 = scmp.le.s32.totalorder 1, %s12
    %p157 = scmp.lt.s32.totalorder %s12, 3
    %p158 = pnand %p156, %p157
    %p159 = pneg %p158
    // Predicated region
    $region9: #{tpu_custom_call.1} parent=5 // pred_check
      _
    $region10: #{tpu_custom_call.1} parent=5 // pred_check_branch
      %161 = sbr.rel (%p158) target = $region12
    $region11: #{tpu_custom_call.1} parent=5 // pred_region
      %s162 = ssub.s32 %s12, 1
      // Predicated region
      $region13: #{tpu_custom_call.1} parent=11 // pred_check
        %p163 = pneg %p59
      $region14: #{tpu_custom_call.1} parent=11 // pred_check_branch
        %165 = sbr.rel (%p163) target = $region16
      $region15: #{tpu_custom_call.1} parent=11 // pred_region
        _
      $region16: #{tpu_custom_call.1} parent=11 // pred_fallthru
        _
      // Predicated region
      $region17: #{tpu_custom_call.1} parent=11 // pred_check
        %p166 = pneg %p80
      $region18: #{tpu_custom_call.1} parent=11 // pred_check_branch
        %168 = sbr.rel (%p166) target = $region20
      $region19: #{tpu_custom_call.1} parent=11 // pred_region
        _
      $region20: #{tpu_custom_call.1} parent=11 // pred_fallthru
        _
      // Predicated region
      $region21: #{tpu_custom_call.1} parent=11 // pred_check
        %p169 = pneg %p101
      $region22: #{tpu_custom_call.1} parent=11 // pred_check_branch
        %171 = sbr.rel (%p169) target = $region24
      $region23: #{tpu_custom_call.1} parent=11 // pred_region
        _
      $region24: #{tpu_custom_call.1} parent=11 // pred_fallthru
        _
      // Predicated region
      $region25: #{tpu_custom_call.1} parent=11 // pred_check
        %p172 = pneg %p122
      $region26: #{tpu_custom_call.1} parent=11 // pred_check_branch
        %174 = sbr.rel (%p172) target = $region28
      $region27: #{tpu_custom_call.1} parent=11 // pred_region
        _
      $region28: #{tpu_custom_call.1} parent=11 // pred_fallthru
        _
    $region12: #{tpu_custom_call.1} parent=5 // pred_fallthru
      _
    %p175 = scmp.lt.s32.totalorder %s12, 2
    // Predicated region
    $region29: #{tpu_custom_call.1} parent=5 // pred_check
      %p176 = pneg %p175
    $region30: #{tpu_custom_call.1} parent=5 // pred_check_branch
      %178 = sbr.rel (%p176) target = $region32
    $region31: #{tpu_custom_call.1} parent=5 // pred_region
      // Predicated region
      $region33: #{tpu_custom_call.1} parent=31 // pred_check
        %p179 = pneg %p32
      $region34: #{tpu_custom_call.1} parent=31 // pred_check_branch
        %181 = sbr.rel (%p179) target = $region36
      $region35: #{tpu_custom_call.1} parent=31 // pred_region
        %s182 = smul.u32 16, %s12
        %p183 = scmp.lt.s32.totalorder %s182, 31
        %s184 = scalar_select %p183, %s182, 31
        %s185 = smul.addr %s184, 4
        %s186 = scalar_lea.vmem %s0, %s185
        %s187 = smul.u32 16, %s12
      $region36: #{tpu_custom_call.1} parent=31 // pred_fallthru
        _
    $region32: #{tpu_custom_call.1} parent=5 // pred_fallthru
      _
    %p188 = scmp.le.s32.totalorder 1, %s12
    %p189 = scmp.lt.s32.totalorder %s12, 3
    %p190 = pnand %p188, %p189
    %p191 = pneg %p190
    // Predicated region
    $region37: #{tpu_custom_call.1} parent=5 // pred_check
      _
    $region38: #{tpu_custom_call.1} parent=5 // pred_check_branch
      %193 = sbr.rel (%p190) target = $region40
    $region39: #{tpu_custom_call.1} parent=5 // pred_region
      %s194 = ssub.s32 %s12, 1
      %s195 = smul.u32 16, %s17
      %p196 = scmp.lt.s32.totalorder %s195, 31
      %s197 = scalar_select %p196, %s195, 31
      %s198 = smul.addr %s197, 4
      %s199 = scalar_lea.vmem %s0, %s198
      %p200 = pneg %p38
      %p201 = pneg %p35
      %p202 = pneg %p59
      %p203 = pneg %p56
      %p204 = pneg %p80
      %p205 = pneg %p77
      %p206 = pneg %p101
      %p207 = pneg %p98
      %p208 = pneg %p122
      %p209 = pneg %p119
      %p210 = pneg %p148
      %p211 = pneg %p145
      %s212 = smul.u32 16, %s17
      %p213 = scmp.lt.s32.totalorder %s212, 31
      %s214 = scalar_select %p213, %s212, 31
      %s215 = smul.addr %s214, 8
      %s216 = scalar_lea.vmem %s5, %s215
      %s217 = smul.u32 16, %s17
      %p218 = scmp.lt.s32.totalorder %s217, 31
      %s219 = scalar_select %p218, %s217, 31
      %s220 = smul.addr %s219, 4
      %s221 = scalar_lea.vmem %s0, %s220
      %s222 = smul.u32 16, %s17
      %s223 = smul.u32 16, %s17
      %p224 = scmp.lt.s32.totalorder %s223, 31
      %s225 = scalar_select %p224, %s223, 31
      %s226 = smul.addr %s225, 8
      %s227 = scalar_lea.vmem %s5, %s226
      %s228 = smul.u32 16, %s17
      %v230 = vld [vmem:[%s221] sm:$0xf]
      %v231 = vld [vmem:[%s221 + $0x4] sm:$0xf]
      %v232 = vld [vmem:[%s221 + $0x8] sm:$0xf]
      %v233 = vld [vmem:[%s221 + $0xc] sm:$0xf]
      %v234 = vld [vmem:[%s221 + $0x10] sm:$0xf]
      %v235 = vld [vmem:[%s221 + $0x14] sm:$0xf]
      %v236 = vld [vmem:[%s221 + $0x18] sm:$0xf]
      %v237 = vld [vmem:[%s221 + $0x1c] sm:$0xf]
      %v238 = vld [vmem:[%s221 + $0x20] sm:$0xf]
      %v239 = vld [vmem:[%s221 + $0x24] sm:$0xf]
      %v240 = vld [vmem:[%s221 + $0x28] sm:$0xf]
      %v241 = vld [vmem:[%s221 + $0x2c] sm:$0xf]
      %v242 = vld [vmem:[%s221 + $0x30] sm:$0xf]
      %v243 = vld [vmem:[%s221 + $0x34] sm:$0xf]
      %v244 = vld [vmem:[%s221 + $0x38] sm:$0xf]
      %v245 = vld [vmem:[%s221 + $0x3c] sm:$0xf]
      %v246 = vld [vmem:[%s1] sm:$0xf]
      %v247 = vld [vmem:[%s1 + $0x4] sm:$0xf]
      %v248 = vld [vmem:[%s1 + $0x8] sm:$0xf]
      %v249 = vld [vmem:[%s1 + $0xc] sm:$0xf]
      %v250 = vld [vmem:[%s2] sm:$0x1]
      %v252 = vlaneseq
      %v253 = vshrl.u32 %v252, 7
      %v254 = vsub.s32 0, %v253
      %v255 = vrot.slane %v250, %v254
      %v273 = vunpack.c.l.b16 %v230
      %v274 = vunpack.c.l.b16 %v231
      %v275 = vunpack.c.l.b16 %v232
      %v276 = vunpack.c.l.b16 %v233
      %v277 = vunpack.c.l.b16 %v234
      %v278 = vunpack.c.l.b16 %v235
      %v279 = vunpack.c.l.b16 %v236
      %v280 = vunpack.c.l.b16 %v237
      %v281 = vunpack.c.l.b16 %v238
      %v282 = vunpack.c.l.b16 %v239
      %v283 = vunpack.c.l.b16 %v240
      %v284 = vunpack.c.l.b16 %v241
      %v285 = vunpack.c.l.b16 %v242
      %v286 = vunpack.c.l.b16 %v243
      %v287 = vunpack.c.l.b16 %v244
      %v288 = vunpack.c.l.b16 %v245
      %v289 = vpack.c.b16 %v274, %v273
      %v290 = vpack.c.b16 %v276, %v275
      %v291 = vpack.c.b16 %v278, %v277
      %v292 = vpack.c.b16 %v280, %v279
      %v293 = vpack.c.b16 %v282, %v281
      %v294 = vpack.c.b16 %v284, %v283
      %v295 = vpack.c.b16 %v286, %v285
      %v296 = vpack.c.b16 %v288, %v287
      %v301 = vunpack.c.l.b16 %v246
      %v302 = vunpack.c.l.b16 %v247
      %v303 = vunpack.c.l.b16 %v248
      %v304 = vunpack.c.l.b16 %v249
      %v305 = vpack.c.b16 %v302, %v301
      %v306 = vpack.c.b16 %v304, %v303
      %vm309 = vcmask 261120
      %v311 = vsel %vm309, %v289, 0
      %v314 = vsel %vm309, %v290, 0
      %v317 = vsel %vm309, %v291, 0
      %v320 = vsel %vm309, %v292, 0
      %v323 = vsel %vm309, %v293, 0
      %v326 = vsel %vm309, %v294, 0
      %v329 = vsel %vm309, %v295, 0
      %v332 = vsel %vm309, %v296, 0
      %334 = vmatprep.subr.bf16.mxu0 0
      %335 = vmatpush1.bf16.msra.mxu0 %v305
      %336 = vmatprep.subr.bf16.mxu0 0
      %337 = vmatpush1.bf16.msra.mxu0 %v306
      %338 = vmatprep.subr.bf16.mxu0 0
      %339 = vmatpush1.bf16.msra.mxu0 0
      %340 = vmatprep.subr.bf16.mxu0 0
      %341 = vmatpush1.bf16.msra.mxu0 0
      %342 = vmatprep.subr.bf16.mxu0 0
      %343 = vmatpush1.bf16.msra.mxu0 0
      %344 = vmatprep.subr.bf16.mxu0 0
      %345 = vmatpush1.bf16.msra.mxu0 0
      %346 = vmatprep.subr.bf16.mxu0 0
      %347 = vmatpush1.bf16.msra.mxu0 0
      %348 = vmatprep.subr.bf16.mxu0 0
      %349 = vmatpush1.bf16.msra.mxu0 0
      %350 = vmatprep.subr.bf16.mxu0 0
      %351 = vmatpush1.bf16.msra.mxu0 0
      %352 = vmatprep.subr.bf16.mxu0 0
      %353 = vmatpush1.bf16.msra.mxu0 0
      %354 = vmatprep.subr.bf16.mxu0 0
      %355 = vmatpush1.bf16.msra.mxu0 0
      %356 = vmatprep.subr.bf16.mxu0 0
      %357 = vmatpush1.bf16.msra.mxu0 0
      %358 = vmatprep.subr.bf16.mxu0 0
      %359 = vmatpush1.bf16.msra.mxu0 0
      %360 = vmatprep.subr.bf16.mxu0 0
      %361 = vmatpush1.bf16.msra.mxu0 0
      %362 = vmatprep.subr.bf16.mxu0 0
      %363 = vmatpush1.bf16.msra.mxu0 0
      %364 = vmatprep.subr.bf16.mxu0 0
      %365 = vmatpush1.bf16.msra.mxu0 0
      %366 = vmatprep.mubr.bf16.mxu0 0
      %367 = vmatmul.mubr.bf16.gmra.mrb[0].mxu0 %v311
      %v368 = vpop.f32.mrb[0].mxu0
      %v369 = vadd.f32 %v255, %v368
      %v370 = vpop.f32.mrb[0].mxu0
      %v371 = vpop.f32.mrb[0].mxu0
      %v372 = vadd.f32 %v255, %v371
      %v373 = vpop.f32.mrb[0].mxu0
      %374 = vmatprep.mubr.bf16.mxu0 0
      %375 = vmatmul.mubr.bf16.gmra.mrb[0].mxu0 %v314
      %v376 = vpop.f32.mrb[0].mxu0
      %v377 = vadd.f32 %v255, %v376
      %v378 = vpop.f32.mrb[0].mxu0
      %v379 = vpop.f32.mrb[0].mxu0
      %v380 = vadd.f32 %v255, %v379
      %v381 = vpop.f32.mrb[0].mxu0
      %382 = vmatprep.mubr.bf16.mxu0 0
      %383 = vmatmul.mubr.bf16.gmra.mrb[0].mxu0 %v317
      %v384 = vpop.f32.mrb[0].mxu0
      %v385 = vadd.f32 %v255, %v384
      %v386 = vpop.f32.mrb[0].mxu0
      %v387 = vpop.f32.mrb[0].mxu0
      %v388 = vadd.f32 %v255, %v387
      %v389 = vpop.f32.mrb[0].mxu0
      %390 = vmatprep.mubr.bf16.mxu0 0
      %391 = vmatmul.mubr.bf16.gmra.mrb[0].mxu0 %v320
      %v392 = vpop.f32.mrb[0].mxu0
      %v393 = vadd.f32 %v255, %v392
      %v394 = vpop.f32.mrb[0].mxu0
      %v395 = vpop.f32.mrb[0].mxu0
      %v396 = vadd.f32 %v255, %v395
      %v397 = vpop.f32.mrb[0].mxu0
      %398 = vmatprep.mubr.bf16.mxu0 0
      %399 = vmatmul.mubr.bf16.gmra.mrb[0].mxu0 %v323
      %v400 = vpop.f32.mrb[0].mxu0
      %v401 = vadd.f32 %v255, %v400
      %v402 = vpop.f32.mrb[0].mxu0
      %v403 = vpop.f32.mrb[0].mxu0
      %v404 = vadd.f32 %v255, %v403
      %v405 = vpop.f32.mrb[0].mxu0
      %406 = vmatprep.mubr.bf16.mxu0 0
      %407 = vmatmul.mubr.bf16.gmra.mrb[0].mxu0 %v326
      %v408 = vpop.f32.mrb[0].mxu0
      %v409 = vadd.f32 %v255, %v408
      %v410 = vpop.f32.mrb[0].mxu0
      %v411 = vpop.f32.mrb[0].mxu0
      %v412 = vadd.f32 %v255, %v411
      %v413 = vpop.f32.mrb[0].mxu0
      %414 = vmatprep.mubr.bf16.mxu0 0
      %415 = vmatmul.mubr.bf16.gmra.mrb[0].mxu0 %v329
      %v416 = vpop.f32.mrb[0].mxu0
      %v417 = vadd.f32 %v255, %v416
      %v418 = vpop.f32.mrb[0].mxu0
      %v419 = vpop.f32.mrb[0].mxu0
      %v420 = vadd.f32 %v255, %v419
      %v421 = vpop.f32.mrb[0].mxu0
      %422 = vmatprep.mubr.bf16.mxu0 0
      %423 = vmatmul.mubr.bf16.gmra.mrb[0].mxu0 %v332
      %v424 = vpop.f32.mrb[0].mxu0
      %v425 = vadd.f32 %v255, %v424
      %v426 = vpop.f32.mrb[0].mxu0
      %v427 = vpop.f32.mrb[0].mxu0
      %v428 = vadd.f32 %v255, %v427
      %v429 = vpop.f32.mrb[0].mxu0
      %430 = vdwg.mxu0
      %v431 = vmax.f32 %v369, 0.0
      %v432 = vmax.f32 %v372, 0.0
      %v433 = vmax.f32 %v377, 0.0
      %v434 = vmax.f32 %v380, 0.0
      %v435 = vmax.f32 %v385, 0.0
      %v436 = vmax.f32 %v388, 0.0
      %v437 = vmax.f32 %v393, 0.0
      %v438 = vmax.f32 %v396, 0.0
      %v439 = vmax.f32 %v401, 0.0
      %v440 = vmax.f32 %v404, 0.0
      %v441 = vmax.f32 %v409, 0.0
      %v442 = vmax.f32 %v412, 0.0
      %v443 = vmax.f32 %v417, 0.0
      %v444 = vmax.f32 %v420, 0.0
      %v445 = vmax.f32 %v425, 0.0
      %v446 = vmax.f32 %v428, 0.0
      %v447 = vld [vmem:[%s3] sm:$0x1]
      %v449 = vlaneseq
      %v450 = vshrl.u32 %v449, 7
      %v451 = vsub.s32 0, %v450
      %v452 = vrot.slane %v447, %v451
      %v454 = vmul.f32 %v431, %v452
      %v455 = vmul.f32 %v432, %v452
      %v456 = vmul.f32 %v433, %v452
      %v457 = vmul.f32 %v434, %v452
      %v458 = vmul.f32 %v435, %v452
      %v459 = vmul.f32 %v436, %v452
      %v460 = vmul.f32 %v437, %v452
      %v461 = vmul.f32 %v438, %v452
      %v462 = vmul.f32 %v439, %v452
      %v463 = vmul.f32 %v440, %v452
      %v464 = vmul.f32 %v441, %v452
      %v465 = vmul.f32 %v442, %v452
      %v466 = vmul.f32 %v443, %v452
      %v467 = vmul.f32 %v444, %v452
      %v468 = vmul.f32 %v445, %v452
      %v469 = vmul.f32 %v446, %v452
      %470 = vadd.xlane.f32.xlu0 %v454
      %v471 = vpop.xlane.xlu0 %470
      %472 = vadd.xlane.f32.xlu0 %v455
      %v473 = vpop.xlane.xlu0 %472
      %474 = vadd.xlane.f32.xlu0 %v456
      %v475 = vpop.xlane.xlu0 %474
      %476 = vadd.xlane.f32.xlu0 %v457
      %v477 = vpop.xlane.xlu0 %476
      %478 = vadd.xlane.f32.xlu0 %v458
      %v479 = vpop.xlane.xlu0 %478
      %480 = vadd.xlane.f32.xlu0 %v459
      %v481 = vpop.xlane.xlu0 %480
      %482 = vadd.xlane.f32.xlu0 %v460
      %v483 = vpop.xlane.xlu0 %482
      %484 = vadd.xlane.f32.xlu0 %v461
      %v485 = vpop.xlane.xlu0 %484
      %486 = vadd.xlane.f32.xlu0 %v462
      %v487 = vpop.xlane.xlu0 %486
      %488 = vadd.xlane.f32.xlu0 %v463
      %v489 = vpop.xlane.xlu0 %488
      %490 = vadd.xlane.f32.xlu0 %v464
      %v491 = vpop.xlane.xlu0 %490
      %492 = vadd.xlane.f32.xlu0 %v465
      %v493 = vpop.xlane.xlu0 %492
      %494 = vadd.xlane.f32.xlu0 %v466
      %v495 = vpop.xlane.xlu0 %494
      %496 = vadd.xlane.f32.xlu0 %v467
      %v497 = vpop.xlane.xlu0 %496
      %498 = vadd.xlane.f32.xlu0 %v468
      %v499 = vpop.xlane.xlu0 %498
      %500 = vadd.xlane.f32.xlu0 %v469
      %v501 = vpop.xlane.xlu0 %500
      %s502 = sld [smem:[#allocation2]]
      %v503 = vstv %s502
      %v504 = vadd.f32 %v471, %v503
      %v505 = vadd.f32 %v473, %v503
      %v506 = vadd.f32 %v475, %v503
      %v507 = vadd.f32 %v477, %v503
      %v508 = vadd.f32 %v479, %v503
      %v509 = vadd.f32 %v481, %v503
      %v510 = vadd.f32 %v483, %v503
      %v511 = vadd.f32 %v485, %v503
      %v512 = vadd.f32 %v487, %v503
      %v513 = vadd.f32 %v489, %v503
      %v514 = vadd.f32 %v491, %v503
      %v515 = vadd.f32 %v493, %v503
      %v516 = vadd.f32 %v495, %v503
      %v517 = vadd.f32 %v497, %v503
      %v518 = vadd.f32 %v499, %v503
      %v519 = vadd.f32 %v501, %v503
      %v520 = vsub.f32 0.0, %v504
      %v521 = vsub.f32 0.0, %v505
      %v522 = vsub.f32 0.0, %v506
      %v523 = vsub.f32 0.0, %v507
      %v524 = vsub.f32 0.0, %v508
      %v525 = vsub.f32 0.0, %v509
      %v526 = vsub.f32 0.0, %v510
      %v527 = vsub.f32 0.0, %v511
      %v528 = vsub.f32 0.0, %v512
      %v529 = vsub.f32 0.0, %v513
      %v530 = vsub.f32 0.0, %v514
      %v531 = vsub.f32 0.0, %v515
      %v532 = vsub.f32 0.0, %v516
      %v533 = vsub.f32 0.0, %v517
      %v534 = vsub.f32 0.0, %v518
      %v535 = vsub.f32 0.0, %v519
      %v536 = vmul.f32 %v520, 1.442695
      %v537 = vpow.pop %v536
      %v538 = vmul.f32 %v521, 1.442695
      %v539 = vpow.pop %v538
      %v540 = vmul.f32 %v522, 1.442695
      %v541 = vpow.pop %v540
      %v542 = vmul.f32 %v523, 1.442695
      %v543 = vpow.pop %v542
      %v544 = vmul.f32 %v524, 1.442695
      %v545 = vpow.pop %v544
      %v546 = vmul.f32 %v525, 1.442695
      %v547 = vpow.pop %v546
      %v548 = vmul.f32 %v526, 1.442695
      %v549 = vpow.pop %v548
      %v550 = vmul.f32 %v527, 1.442695
      %v551 = vpow.pop %v550
      %v552 = vmul.f32 %v528, 1.442695
      %v553 = vpow.pop %v552
      %v554 = vmul.f32 %v529, 1.442695
      %v555 = vpow.pop %v554
      %v556 = vmul.f32 %v530, 1.442695
      %v557 = vpow.pop %v556
      %v558 = vmul.f32 %v531, 1.442695
      %v559 = vpow.pop %v558
      %v560 = vmul.f32 %v532, 1.442695
      %v561 = vpow.pop %v560
      %v562 = vmul.f32 %v533, 1.442695
      %v563 = vpow.pop %v562
      %v564 = vmul.f32 %v534, 1.442695
      %v565 = vpow.pop %v564
      %v566 = vmul.f32 %v535, 1.442695
      %v567 = vpow.pop %v566
      %v568 = vadd.f32 %v537, 1.0
      %v569 = vadd.f32 %v539, 1.0
      %v570 = vadd.f32 %v541, 1.0
      %v571 = vadd.f32 %v543, 1.0
      %v572 = vadd.f32 %v545, 1.0
      %v573 = vadd.f32 %v547, 1.0
      %v574 = vadd.f32 %v549, 1.0
      %v575 = vadd.f32 %v551, 1.0
      %v576 = vadd.f32 %v553, 1.0
      %v577 = vadd.f32 %v555, 1.0
      %v578 = vadd.f32 %v557, 1.0
      %v579 = vadd.f32 %v559, 1.0
      %v580 = vadd.f32 %v561, 1.0
      %v581 = vadd.f32 %v563, 1.0
      %v582 = vadd.f32 %v565, 1.0
      %v583 = vadd.f32 %v567, 1.0
      %v584 = vrcp.pop %v568
      %v585 = vrcp.pop %v569
      %v586 = vrcp.pop %v570
      %v587 = vrcp.pop %v571
      %v588 = vrcp.pop %v572
      %v589 = vrcp.pop %v573
      %v590 = vrcp.pop %v574
      %v591 = vrcp.pop %v575
      %v592 = vrcp.pop %v576
      %v593 = vrcp.pop %v577
      %v594 = vrcp.pop %v578
      %v595 = vrcp.pop %v579
      %v596 = vrcp.pop %v580
      %v597 = vrcp.pop %v581
      %v598 = vrcp.pop %v582
      %v599 = vrcp.pop %v583
      %vm600 = vcmask 7168
      %601 = vst.msk [vmem:[%s227] sm:$0xff] %vm600, %v584
      %602 = vst.msk [vmem:[%s227 + $0x8] sm:$0xff] %vm600, %v585
      %603 = vst.msk [vmem:[%s227 + $0x10] sm:$0xff] %vm600, %v586
      %604 = vst.msk [vmem:[%s227 + $0x18] sm:$0xff] %vm600, %v587
      %605 = vst.msk [vmem:[%s227 + $0x20] sm:$0xff] %vm600, %v588
      %606 = vst.msk [vmem:[%s227 + $0x28] sm:$0xff] %vm600, %v589
      %607 = vst.msk [vmem:[%s227 + $0x30] sm:$0xff] %vm600, %v590
      %608 = vst.msk [vmem:[%s227 + $0x38] sm:$0xff] %vm600, %v591
      %609 = vst.msk [vmem:[%s227 + $0x40] sm:$0xff] %vm600, %v592
      %610 = vst.msk [vmem:[%s227 + $0x48] sm:$0xff] %vm600, %v593
      %611 = vst.msk [vmem:[%s227 + $0x50] sm:$0xff] %vm600, %v594
      %612 = vst.msk [vmem:[%s227 + $0x58] sm:$0xff] %vm600, %v595
      %613 = vst.msk [vmem:[%s227 + $0x60] sm:$0xff] %vm600, %v596
      %614 = vst.msk [vmem:[%s227 + $0x68] sm:$0xff] %vm600, %v597
      %615 = vst.msk [vmem:[%s227 + $0x70] sm:$0xff] %vm600, %v598
      %616 = vst.msk [vmem:[%s227 + $0x78] sm:$0xff] %vm600, %v599
      %s617 = smul.u32 16, %s17
      %p618 = scmp.lt.s32.totalorder %s617, 31
      %s619 = scalar_select %p618, %s617, 31
      %s620 = smul.addr %s619, 8
      %s621 = scalar_lea.vmem %s5, %s620
      // Predicated region
      $region41: #{tpu_custom_call.1} parent=39 // pred_check
        %p622 = pneg %p145
      $region42: #{tpu_custom_call.1} parent=39 // pred_check_branch
        %624 = sbr.rel (%p622) target = $region44
      $region43: #{tpu_custom_call.1} parent=39 // pred_region
        %s625 = smul.u32 16, %s17
      $region44: #{tpu_custom_call.1} parent=39 // pred_fallthru
        _
    $region40: #{tpu_custom_call.1} parent=5 // pred_fallthru
      _
    %p626 = scmp.le.s32.totalorder 2, %s12
    // Predicated region
    $region45: #{tpu_custom_call.1} parent=5 // pred_check
      %p627 = pneg %p626
    $region46: #{tpu_custom_call.1} parent=5 // pred_check_branch
      %629 = sbr.rel (%p627) target = $region48
    $region47: #{tpu_custom_call.1} parent=5 // pred_region
      %s630 = ssub.s32 %s12, 2
      // Predicated region
      $region49: #{tpu_custom_call.1} parent=47 // pred_check
        %p631 = pneg %p151
      $region50: #{tpu_custom_call.1} parent=47 // pred_check_branch
        %633 = sbr.rel (%p631) target = $region52
      $region51: #{tpu_custom_call.1} parent=47 // pred_region
        %s634 = smul.u32 16, %s18
        %p635 = scmp.lt.s32.totalorder %s634, 31
        %s636 = scalar_select %p635, %s634, 31
        %s637 = smul.addr %s636, 8
        %s638 = scalar_lea.vmem %s5, %s637
      $region52: #{tpu_custom_call.1} parent=47 // pred_fallthru
        _
    $region48: #{tpu_custom_call.1} parent=5 // pred_fallthru
      _
  $region6: #{tpu_custom_call.1} parent=0 // loop_footer
    %s16 = sadd.s32 1, %s12
  $region7: #{tpu_custom_call.1} parent=0 // loop_footer_branch
    %11 = sbr.rel target = $region3
  $region8: #{tpu_custom_call.1} parent=0 // loop_exit
    _

</llo_original>
